<compile_context>
chip_gen: v7x
topology: tpu7x:2x2x1
jax: 0.10.0
libtpu: 0.0.40
codegen_flags: <defaults>
</compile_context>

<pallas_src>
import functools

import jax
import jax.numpy as jnp
from jax import lax
from jax.experimental import pallas as pl
from jax.experimental.pallas import tpu as pltpu


_CHUNK = 512  # lanes per inner compute chunk (bounds vreg pressure)


def _mlp_kernel(x_ref, w1_ref, b1_ref, w2_ref, b2_ref, o_ref, *, chunk):
    """Fused fc1 -> ReLU -> fc2 on one [L, TN] lane-tile (nodes on lanes).

    x_ref : [L, TN]   history window for TN nodes (lanes)
    w1_ref: [H, L]    fc1 weight (PyTorch [out, in] layout), resident in VMEM
    b1_ref: [H, 1]
    w2_ref: [P, H]    fc2 weight, resident in VMEM
    b2_ref: [P, 1]
    o_ref : [P, TN]
    """
    tn = x_ref.shape[-1]            # static block width
    n_full = tn // chunk
    rem = tn - n_full * chunk

    # Hoist the tiny resident operands out of the chunk loop (no re-loads,
    # no per-iteration broadcasts).
    w1 = w1_ref[...]
    b1 = b1_ref[...]
    w2 = w2_ref[...]
    b2 = b2_ref[...]

    def apply(x):
        h = jnp.dot(w1, x, preferred_element_type=jnp.float32) + b1
        h = jnp.maximum(h, 0.0)                                  # ReLU in f32
        y = jnp.dot(w2, h, preferred_element_type=jnp.float32) + b2
        return y.astype(o_ref.dtype)

    if n_full > 0:
        # Chunk over 512-lane slabs: keeps the live [H, chunk] f32
        # intermediate small enough to avoid spill even when TN is tens of
        # thousands of lanes, so compute hides under the big-block DMAs.
        def body(c, carry):
            start = pl.multiple_of(c * chunk, chunk)
            o_ref[:, pl.ds(start, chunk)] = apply(x_ref[:, pl.ds(start, chunk)])
            return carry

        lax.fori_loop(0, n_full, body, 0, unroll=n_full <= 4)

    if rem > 0:
        start = n_full * chunk       # static
        o_ref[:, pl.ds(start, rem)] = apply(x_ref[:, pl.ds(start, rem)])


def _pick_lane_tile(n_nodes, batch, l, p, itemsize):
    """Choose the node (lane) tile size TN for one grid step.

    Sized so the x + out blocks together are ~2 MiB (amortizes per-grid-step
    overhead, long lane-dense DMAs), rounded to a multiple of _CHUNK, capped
    at 32768 lanes.  Any TN < N is a multiple of 128 (lane constraint).  On
    v7x (2 TCs) an odd batch with a single node tile would idle one core, so
    in that case the node axis is split in two.
    """
    per_lane_bytes = (l + p) * itemsize
    tn = (2 * 1024 * 1024) // max(per_lane_bytes, 1)
    tn = max(_CHUNK, min(32768, (tn // _CHUNK) * _CHUNK))
    if tn >= n_nodes:
        tn = n_nodes  # full node dim is always a legal block size
        if batch % 2 != 0 and n_nodes >= 2 * _CHUNK:
            half = -(-n_nodes // 2)
            tn = ((half + 127) // 128) * 128   # lane-aligned -> 2 tiles
    return tn


@functools.partial(jax.jit, static_argnames=("lane_tile",))
def mlp_forward(history_data, w1, b1, w2, b2, lane_tile=None):
    """history_data: [B, L, N, C] (or pre-sliced [B, L, N]) -> [B, P, N, 1].

    Weights use PyTorch nn.Linear layout: w1 [H, L], b1 [H], w2 [P, H], b2 [P].
    """
    if history_data.ndim == 4:
        # TODO(synk): a caller-provided [B, L, N] (or channel-major) input
        # would remove this extra HBM pass (it reads C=4x the bytes the
        # kernel needs); kept here to preserve the module's [B, L, N, C] API.
        x = history_data[..., 0]
    else:
        x = history_data
    B, L, N = x.shape
    H = w1.shape[0]
    P = w2.shape[0]

    itemsize = jnp.dtype(x.dtype).itemsize
    if lane_tile is None:
        TN = _pick_lane_tile(N, B, L, P, itemsize)
    else:
        TN = int(lane_tile)
        if TN != N and TN % 128 != 0:
            raise ValueError("lane_tile must equal N or be a multiple of 128")
    n_tiles = pl.cdiv(N, TN)   # ragged last tile handled by Pallas masking

    b1_2d = b1.reshape(H, 1)
    b2_2d = b2.reshape(P, 1)

    cost = pl.CostEstimate(
        flops=2 * B * N * (L * H + H * P),
        transcendentals=0,
        bytes_accessed=(B * L * N + B * P * N) * itemsize
        + (H * L + H + P * H + P) * jnp.dtype(w1.dtype).itemsize,
    )

    kernel = functools.partial(_mlp_kernel, chunk=_CHUNK)

    out3d = pl.pallas_call(
        kernel,
        out_shape=jax.ShapeDtypeStruct((B, P, N), x.dtype),
        grid_spec=pltpu.PrefetchScalarGridSpec(
            num_scalar_prefetch=0,
            grid=(B, n_tiles),
            in_specs=[
                # x: one batch element, full L on sublanes, TN nodes on lanes.
                pl.BlockSpec((pl.Squeezed(), L, TN), lambda b, n: (b, 0, n)),
                pl.BlockSpec((H, L), lambda b, n: (0, 0)),   # W1 resident
                pl.BlockSpec((H, 1), lambda b, n: (0, 0)),   # b1
                pl.BlockSpec((P, H), lambda b, n: (0, 0)),   # W2 resident
                pl.BlockSpec((P, 1), lambda b, n: (0, 0)),   # b2
            ],
            out_specs=pl.BlockSpec((pl.Squeezed(), P, TN), lambda b, n: (b, 0, n)),
        ),
        compiler_params=pltpu.CompilerParams(
            dimension_semantics=("parallel", "parallel"),
            # Guardrail: stays within the v7x scoped default (64 MiB physical);
            # actual usage with double buffering is a few MiB.
            vmem_limit_bytes=32 * 1024 * 1024,
        ),
        cost_estimate=cost,
    )(x, w1, b1_2d, w2, b2_2d)

    return out3d[..., None]          # [B, P, N, 1] -- free reshape


def init_params(key, history_seq_len, prediction_seq_len, hidden_dim):
    """Deterministic init mirroring nn.Linear (uniform(-1/sqrt(fan_in), +)).

    Weights are stored in PyTorch layout: w1 [H, L], w2 [P, H].
    """
    k1, k2, k3, k4 = jax.random.split(key, 4)
    bound1 = 1.0 / jnp.sqrt(jnp.float32(history_seq_len))
    bound2 = 1.0 / jnp.sqrt(jnp.float32(hidden_dim))
    w1 = jax.random.uniform(k1, (hidden_dim, history_seq_len),
                            jnp.float32, -bound1, bound1)
    b1 = jax.random.uniform(k2, (hidden_dim,), jnp.float32, -bound1, bound1)
    w2 = jax.random.uniform(k3, (prediction_seq_len, hidden_dim),
                            jnp.float32, -bound2, bound2)
    b2 = jax.random.uniform(k4, (prediction_seq_len,),
                            jnp.float32, -bound2, bound2)
    return w1, b1, w2, b2


if __name__ == "__main__":
    def reference(history_data, w1, b1, w2, b2):
        # Pure-JAX reference of the PyTorch module's math.
        x = jnp.transpose(history_data[..., 0], (0, 2, 1))      # [B, N, L]
        y = jnp.maximum(x @ w1.T + b1, 0.0) @ w2.T + b2         # [B, N, P]
        return jnp.transpose(y, (0, 2, 1))[..., None]           # [B, P, N, 1]

    # Small shapes consistent with the module.
    B, L, N, C = 2, 8, 16, 4          # history_seq_len = L
    P, H = 12, 32                     # prediction_seq_len, hidden_dim

    key = jax.random.PRNGKey(0)
    kx, kp = jax.random.split(key)
    history_data = jax.random.normal(kx, (B, L, N, C), jnp.float32)
    future_data = None  # unused by the forward pass (as in the PyTorch module)
    w1, b1, w2, b2 = init_params(kp, L, P, H)

    out = jax.block_until_ready(mlp_forward(history_data, w1, b1, w2, b2))
    assert out.shape == (B, P, N, 1), out.shape
    ref = reference(history_data, w1, b1, w2, b2)
    assert jnp.allclose(out, ref, atol=1e-5, rtol=1e-5)

    # Second check: exercises the in-kernel chunk loop, the ragged last
    # lane-tile (no pad / no output slice), and the odd-batch node split.
    B2, N2 = 1, 1300
    kx2, kp2 = jax.random.split(jax.random.PRNGKey(0))
    hist2 = jax.random.normal(kx2, (B2, L, N2, C), jnp.float32)
    w1b, b1b, w2b, b2b = init_params(kp2, L, P, H)
    out2 = jax.block_until_ready(mlp_forward(hist2, w1b, b1b, w2b, b2b))
    assert out2.shape == (B2, P, N2, 1), out2.shape
    ref2 = reference(hist2, w1b, b1b, w2b, b2b)
    assert jnp.allclose(out2, ref2, atol=1e-5, rtol=1e-5)

    print("KERNEL_OK")
</pallas_src>

<mosaic_0001>
module attributes {stable_mosaic.version = 11 : i64} {
  func.func @_mlp_kernel(%arg0: i32, %arg1: i32, %arg2: memref<1x8x16xf32, #tpu.memory_space<vmem>>, %arg3: memref<32x8xf32, #tpu.memory_space<vmem>>, %arg4: memref<32x1xf32, #tpu.memory_space<vmem>>, %arg5: memref<12x32xf32, #tpu.memory_space<vmem>>, %arg6: memref<12x1xf32, #tpu.memory_space<vmem>>, %arg7: memref<1x12x16xf32, #tpu.memory_space<vmem>>) attributes {dimension_semantics = [#tpu.dimension_semantics<parallel>, #tpu.dimension_semantics<parallel>], iteration_bounds = array<i64: 2, 1>, scalar_prefetch = 0 : i64, scratch_operands = 0 : i64, tpu.core_type = #tpu.core_type<tc>, window_params = [{transform_indices = @transform_0, window_bounds = array<i64: 1, 8, 16>}, {pipeline_mode = #tpu.pipeline_mode<synchronous>, transform_indices = @transform_1, window_bounds = array<i64: 32, 8>}, {pipeline_mode = #tpu.pipeline_mode<synchronous>, transform_indices = @transform_2, window_bounds = array<i64: 32, 1>}, {pipeline_mode = #tpu.pipeline_mode<synchronous>, transform_indices = @transform_3, window_bounds = array<i64: 12, 32>}, {pipeline_mode = #tpu.pipeline_mode<synchronous>, transform_indices = @transform_4, window_bounds = array<i64: 12, 1>}, {transform_indices = @transform_5, window_bounds = array<i64: 1, 12, 16>}]} {
    %c0 = arith.constant 0 : index
    %c0_0 = arith.constant 0 : index
    %0 = vector.load %arg3[%c0, %c0_0] : memref<32x8xf32, #tpu.memory_space<vmem>>, vector<32x8xf32>
    %c0_1 = arith.constant 0 : index
    %c0_2 = arith.constant 0 : index
    %1 = vector.load %arg4[%c0_1, %c0_2] : memref<32x1xf32, #tpu.memory_space<vmem>>, vector<32x1xf32>
    %c0_3 = arith.constant 0 : index
    %c0_4 = arith.constant 0 : index
    %2 = vector.load %arg5[%c0_3, %c0_4] : memref<12x32xf32, #tpu.memory_space<vmem>>, vector<12x32xf32>
    %c0_5 = arith.constant 0 : index
    %c0_6 = arith.constant 0 : index
    %3 = vector.load %arg6[%c0_5, %c0_6] : memref<12x1xf32, #tpu.memory_space<vmem>>, vector<12x1xf32>
    %c0_7 = arith.constant 0 : index
    %c0_8 = arith.constant 0 : index
    %c0_9 = arith.constant 0 : index
    %4 = vector.load %arg2[%c0_7, %c0_8, %c0_9] : memref<1x8x16xf32, #tpu.memory_space<vmem>>, vector<1x8x16xf32>
    %5 = vector.shape_cast %4 : vector<1x8x16xf32> to vector<8x16xf32>
    %cst = arith.constant dense<0.000000e+00> : vector<32x16xf32>
    %6 = tpu.matmul %0, %5, %cst {dimension_numbers = #tpu.dot_dimension_numbers<[1], [0], [0], [1], [0, 0, 1, 1], [], []>} : vector<32x8xf32>, vector<8x16xf32>, vector<32x16xf32> -> vector<32x16xf32>
    %7 = vector.broadcast %1 : vector<32x1xf32> to vector<32x16xf32>
    %8 = arith.addf %6, %7 : vector<32x16xf32>
    %cst_10 = arith.constant 0.000000e+00 : f32
    %9 = vector.broadcast %cst_10 : f32 to vector<32x16xf32>
    %10 = arith.maximumf %8, %9 : vector<32x16xf32>
    %cst_11 = arith.constant dense<0.000000e+00> : vector<12x16xf32>
    %11 = tpu.matmul %2, %10, %cst_11 {dimension_numbers = #tpu.dot_dimension_numbers<[1], [0], [0], [1], [0, 0, 1, 1], [], []>} : vector<12x32xf32>, vector<32x16xf32>, vector<12x16xf32> -> vector<12x16xf32>
    %12 = vector.broadcast %3 : vector<12x1xf32> to vector<12x16xf32>
    %13 = arith.addf %11, %12 : vector<12x16xf32>
    %c0_12 = arith.constant 0 : index
    %c0_13 = arith.constant 0 : index
    %c0_14 = arith.constant 0 : index
    %14 = vector.load %arg7[%c0_12, %c0_13, %c0_14] : memref<1x12x16xf32, #tpu.memory_space<vmem>>, vector<1x12x16xf32>
    %15 = vector.shape_cast %14 : vector<1x12x16xf32> to vector<12x16xf32>
    %16 = vector.shape_cast %13 : vector<12x16xf32> to vector<1x12x16xf32>
    tpu.vector_store %arg7[%c0_12, %c0_13, %c0_14], %16 {strides = array<i32>} : memref<1x12x16xf32, #tpu.memory_space<vmem>>, vector<1x12x16xf32>,
    return
  }
  func.func @transform_0(%arg0: i32, %arg1: i32) -> (i32, i32, i32) {
    %c0_i32 = arith.constant 0 : i32
    %c0_i32_0 = arith.constant 0 : i32
    return %arg0, %c0_i32, %arg1 : i32, i32, i32
  }
  func.func @transform_1(%arg0: i32, %arg1: i32) -> (i32, i32) {
    %c0_i32 = arith.constant 0 : i32
    %c0_i32_0 = arith.constant 0 : i32
    %c0_i32_1 = arith.constant 0 : i32
    return %c0_i32, %c0_i32_0 : i32, i32
  }
  func.func @transform_2(%arg0: i32, %arg1: i32) -> (i32, i32) {
    %c0_i32 = arith.constant 0 : i32
    %c0_i32_0 = arith.constant 0 : i32
    %c0_i32_1 = arith.constant 0 : i32
    return %c0_i32, %c0_i32_0 : i32, i32
  }
  func.func @transform_3(%arg0: i32, %arg1: i32) -> (i32, i32) {
    %c0_i32 = arith.constant 0 : i32
    %c0_i32_0 = arith.constant 0 : i32
    %c0_i32_1 = arith.constant 0 : i32
    return %c0_i32, %c0_i32_0 : i32, i32
  }
  func.func @transform_4(%arg0: i32, %arg1: i32) -> (i32, i32) {
    %c0_i32 = arith.constant 0 : i32
    %c0_i32_0 = arith.constant 0 : i32
    %c0_i32_1 = arith.constant 0 : i32
    return %c0_i32, %c0_i32_0 : i32, i32
  }
  func.func @transform_5(%arg0: i32, %arg1: i32) -> (i32, i32, i32) {
    %c0_i32 = arith.constant 0 : i32
    %c0_i32_0 = arith.constant 0 : i32
    return %arg0, %c0_i32, %arg1 : i32, i32, i32
  }
}

</mosaic_0001>

<llo_original>
// kernel: mlp_forward.1
$region0: #{mlp_forward.1}
  #allocation0 [shape = 'u32[]', space=smem, size = 0x4, offset = 0x4, fixed_abs, tag = 'smem constant byte address 0x4 - core index']
  #allocation1 [shape = 'u32[144,128]{1,0:T(1,128)}', space=vmem, size = 0x12000, scoped, tag = 'internal scratch']
  %s0 = inlined_call_operand.vmem [shape: f32[2,8,16], index: 0, kind: input, shape index: {}]
  %s1 = inlined_call_operand.vmem [shape: f32[32,8], index: 1, kind: input, shape index: {}]
  %s2 = inlined_call_operand.vmem [shape: f32[32,1], index: 2, kind: input, shape index: {}]
  %s3 = inlined_call_operand.vmem [shape: f32[12,32], index: 3, kind: input, shape index: {}]
  %s4 = inlined_call_operand.vmem [shape: f32[12,1], index: 4, kind: input, shape index: {}]
  %s5 = inlined_call_operand.vmem [shape: f32[2,12,16], index: 5, kind: output, shape index: {}]
  %s6 = sld [smem:[#allocation0]]
  $region53: #{mlp_forward.1} parent=0
    _
  %s8 = ssub.s32 1, %s6
  %s9 = scalar_select 0, %s8, %s6
  loop: start=0, step=1, limit=4
  $region2: #{mlp_forward.1} parent=0 // loop_pre_header
    _
  $region3: #{mlp_forward.1} parent=0 // loop_header
    %s11 = sphi 0, %s15
    %p12 = scmp.ge.s32.totalorder %s11, 4
    %s18 = sphi 0, %s30
    %s19 = sphi 0, %s26
    %s20 = sphi 0, %s18
    %s21 = sphi 0, %s19
    %s22 = sphi 0, %s20
    %s23 = sphi 0, %s21
    %s35 = sphi 0, %s37
    %s38 = sphi 0, %s35
    %s39 = sphi 0, %s38
    %s55 = sphi 0, %s39
    %s59 = sphi 0, %s59
    %s61 = sphi 0, %s59
    %s62 = sphi 0, %s61
    %s76 = sphi 0, %s62
    %s80 = sphi 0, %s80
    %s82 = sphi 0, %s80
    %s83 = sphi 0, %s82
    %s97 = sphi 0, %s83
    %s101 = sphi 0, %s101
    %s103 = sphi 0, %s101
    %s104 = sphi 0, %s103
    %s118 = sphi 0, %s104
    %s122 = sphi 0, %s122
    %s124 = sphi 0, %s122
    %s125 = sphi 0, %s124
    %s139 = sphi 0, %s125
    %s147 = sphi 0, %s149
    %s150 = sphi 0, %s147
    %s151 = sphi 0, %s150
    %s167 = sphi 0, %s151
  $region4: #{mlp_forward.1} parent=0 // loop_header_branch
    %14 = sbr.rel (%p12) target = $region8
  $region5: #{mlp_forward.1} parent=0 // loop_body
    %s16 = ssub.s32 %s11, 1
    %s17 = ssub.s32 %s11, 2
    %s24 = sadd.s32 1, %s19
    %p25 = scmp.ge.s32.totalorder %s24, 1
    %s26 = scalar_select %p25, 0, %s24
    %s27 = sadd.s32 1, %s18
    %s28 = scalar_select %p25, %s27, %s18
    %p29 = scmp.ge.s32.totalorder %s28, 2
    %s30 = scalar_select %p29, 0, %s28
    %s31 = ssub.s32 %s18, %s30
    %s32 = ssub.s32 %s19, %s26
    %s33 = sor.u32 %s31, %s32
    %p34 = scmp.eq.s32.totalorder %s33, 0
    %s36 = sadd.s32 %s35, 1
    %s37 = scalar_select %p34, %s35, %s36
    %p40 = pneg %p34
    %p41 = scmp.eq.s32.totalorder %s11, 1
    %p42 = por %p40, %p41
    %p43 = scmp.ne.s32.totalorder %s35, %s38
    %p44 = scmp.eq.s32.totalorder %s11, 0
    %p45 = por %p43, %p44
    %p46 = scmp.ne.s32.totalorder %s35, %s38
    %p47 = scmp.eq.s32.totalorder %s16, 1
    %p48 = por %p46, %p47
    %p49 = scmp.ne.s32.totalorder %s38, %s39
    %p50 = scmp.eq.s32.totalorder %s16, 0
    %p51 = por %p49, %p50
    %p52 = scmp.ne.s32.totalorder %s38, %s39
    %p53 = scmp.eq.s32.totalorder %s17, 1
    %p54 = por %p52, %p53
    %p56 = scmp.ne.s32.totalorder %s39, %s55
    %p57 = scmp.eq.s32.totalorder %s17, 0
    %p58 = por %p56, %p57
    %s60 = sadd.s32 %s59, 1
    %p63 = scmp.eq.s32.totalorder %s11, 1
    %p64 = scmp.ne.s32.totalorder %s59, %s61
    %p65 = scmp.eq.s32.totalorder %s11, 0
    %p66 = por %p64, %p65
    %p67 = scmp.ne.s32.totalorder %s59, %s61
    %p68 = scmp.eq.s32.totalorder %s16, 1
    %p69 = por %p67, %p68
    %p70 = scmp.ne.s32.totalorder %s61, %s62
    %p71 = scmp.eq.s32.totalorder %s16, 0
    %p72 = por %p70, %p71
    %p73 = scmp.ne.s32.totalorder %s61, %s62
    %p74 = scmp.eq.s32.totalorder %s17, 1
    %p75 = por %p73, %p74
    %p77 = scmp.ne.s32.totalorder %s62, %s76
    %p78 = scmp.eq.s32.totalorder %s17, 0
    %p79 = por %p77, %p78
    %s81 = sadd.s32 %s80, 1
    %p84 = scmp.eq.s32.totalorder %s11, 1
    %p85 = scmp.ne.s32.totalorder %s80, %s82
    %p86 = scmp.eq.s32.totalorder %s11, 0
    %p87 = por %p85, %p86
    %p88 = scmp.ne.s32.totalorder %s80, %s82
    %p89 = scmp.eq.s32.totalorder %s16, 1
    %p90 = por %p88, %p89
    %p91 = scmp.ne.s32.totalorder %s82, %s83
    %p92 = scmp.eq.s32.totalorder %s16, 0
    %p93 = por %p91, %p92
    %p94 = scmp.ne.s32.totalorder %s82, %s83
    %p95 = scmp.eq.s32.totalorder %s17, 1
    %p96 = por %p94, %p95
    %p98 = scmp.ne.s32.totalorder %s83, %s97
    %p99 = scmp.eq.s32.totalorder %s17, 0
    %p100 = por %p98, %p99
    %s102 = sadd.s32 %s101, 1
    %p105 = scmp.eq.s32.totalorder %s11, 1
    %p106 = scmp.ne.s32.totalorder %s101, %s103
    %p107 = scmp.eq.s32.totalorder %s11, 0
    %p108 = por %p106, %p107
    %p109 = scmp.ne.s32.totalorder %s101, %s103
    %p110 = scmp.eq.s32.totalorder %s16, 1
    %p111 = por %p109, %p110
    %p112 = scmp.ne.s32.totalorder %s103, %s104
    %p113 = scmp.eq.s32.totalorder %s16, 0
    %p114 = por %p112, %p113
    %p115 = scmp.ne.s32.totalorder %s103, %s104
    %p116 = scmp.eq.s32.totalorder %s17, 1
    %p117 = por %p115, %p116
    %p119 = scmp.ne.s32.totalorder %s104, %s118
    %p120 = scmp.eq.s32.totalorder %s17, 0
    %p121 = por %p119, %p120
    %s123 = sadd.s32 %s122, 1
    %p126 = scmp.eq.s32.totalorder %s11, 1
    %p127 = scmp.ne.s32.totalorder %s122, %s124
    %p128 = scmp.eq.s32.totalorder %s11, 0
    %p129 = por %p127, %p128
    %p130 = scmp.ne.s32.totalorder %s122, %s124
    %p131 = scmp.eq.s32.totalorder %s16, 1
    %p132 = por %p130, %p131
    %p133 = scmp.ne.s32.totalorder %s124, %s125
    %p134 = scmp.eq.s32.totalorder %s16, 0
    %p135 = por %p133, %p134
    %p136 = scmp.ne.s32.totalorder %s124, %s125
    %p137 = scmp.eq.s32.totalorder %s17, 1
    %p138 = por %p136, %p137
    %p140 = scmp.ne.s32.totalorder %s125, %s139
    %p141 = scmp.eq.s32.totalorder %s17, 0
    %p142 = por %p140, %p141
    %s143 = ssub.s32 %s18, %s30
    %s144 = ssub.s32 %s19, %s26
    %s145 = sor.u32 %s143, %s144
    %p146 = scmp.eq.s32.totalorder %s145, 0
    %s148 = sadd.s32 %s147, 1
    %s149 = scalar_select %p146, %s147, %s148
    %p152 = pneg %p146
    %p153 = scmp.eq.s32.totalorder %s11, 1
    %p154 = por %p152, %p153
    %p155 = scmp.ne.s32.totalorder %s147, %s150
    %p156 = scmp.eq.s32.totalorder %s11, 0
    %p157 = por %p155, %p156
    %p158 = scmp.ne.s32.totalorder %s147, %s150
    %p159 = scmp.eq.s32.totalorder %s16, 1
    %p160 = por %p158, %p159
    %p161 = scmp.ne.s32.totalorder %s150, %s151
    %p162 = scmp.eq.s32.totalorder %s16, 0
    %p163 = por %p161, %p162
    %p164 = scmp.ne.s32.totalorder %s150, %s151
    %p165 = scmp.eq.s32.totalorder %s17, 1
    %p166 = por %p164, %p165
    %p168 = scmp.ne.s32.totalorder %s151, %s167
    %p169 = scmp.eq.s32.totalorder %s17, 0
    %p170 = por %p168, %p169
    %p171 = scmp.le.s32.totalorder 1, %s11
    %p172 = scmp.lt.s32.totalorder %s11, 3
    %p173 = pnand %p171, %p172
    %p174 = pneg %p173
    // Predicated region
    $region9: #{mlp_forward.1} parent=5 // pred_check
      _
    $region10: #{mlp_forward.1} parent=5 // pred_check_branch
      %176 = sbr.rel (%p173) target = $region12
    $region11: #{mlp_forward.1} parent=5 // pred_region
      %s177 = ssub.s32 %s11, 1
      // Predicated region
      $region13: #{mlp_forward.1} parent=11 // pred_check
        %p178 = pneg %p72
      $region14: #{mlp_forward.1} parent=11 // pred_check_branch
        %180 = sbr.rel (%p178) target = $region16
      $region15: #{mlp_forward.1} parent=11 // pred_region
        _
      $region16: #{mlp_forward.1} parent=11 // pred_fallthru
        _
      // Predicated region
      $region17: #{mlp_forward.1} parent=11 // pred_check
        %p181 = pneg %p93
      $region18: #{mlp_forward.1} parent=11 // pred_check_branch
        %183 = sbr.rel (%p181) target = $region20
      $region19: #{mlp_forward.1} parent=11 // pred_region
        _
      $region20: #{mlp_forward.1} parent=11 // pred_fallthru
        _
      // Predicated region
      $region21: #{mlp_forward.1} parent=11 // pred_check
        %p184 = pneg %p114
      $region22: #{mlp_forward.1} parent=11 // pred_check_branch
        %186 = sbr.rel (%p184) target = $region24
      $region23: #{mlp_forward.1} parent=11 // pred_region
        _
      $region24: #{mlp_forward.1} parent=11 // pred_fallthru
        _
      // Predicated region
      $region25: #{mlp_forward.1} parent=11 // pred_check
        %p187 = pneg %p135
      $region26: #{mlp_forward.1} parent=11 // pred_check_branch
        %189 = sbr.rel (%p187) target = $region28
      $region27: #{mlp_forward.1} parent=11 // pred_region
        _
      $region28: #{mlp_forward.1} parent=11 // pred_fallthru
        _
    $region12: #{mlp_forward.1} parent=5 // pred_fallthru
      _
    %p190 = scmp.lt.s32.totalorder %s11, 2
    // Predicated region
    $region29: #{mlp_forward.1} parent=5 // pred_check
      %p191 = pneg %p190
    $region30: #{mlp_forward.1} parent=5 // pred_check_branch
      %193 = sbr.rel (%p191) target = $region32
    $region31: #{mlp_forward.1} parent=5 // pred_region
      // Predicated region
      $region33: #{mlp_forward.1} parent=31 // pred_check
        %p194 = pneg %p45
      $region34: #{mlp_forward.1} parent=31 // pred_check_branch
        %196 = sbr.rel (%p194) target = $region36
      $region35: #{mlp_forward.1} parent=31 // pred_region
        %p197 = scmp.lt.s32.totalorder %s18, 1
        %s198 = scalar_select %p197, %s18, 1
        %p199 = scmp.lt.s32.totalorder %s19, 0
        %s200 = scalar_select %p199, %s19, 0
        %s201 = sadd.s32 %s200, %s198
        %s202 = smul.addr %s201, 8
        %s203 = scalar_lea.vmem %s0, %s202
      $region36: #{mlp_forward.1} parent=31 // pred_fallthru
        _
    $region32: #{mlp_forward.1} parent=5 // pred_fallthru
      _
    %p204 = scmp.le.s32.totalorder 1, %s11
    %p205 = scmp.lt.s32.totalorder %s11, 3
    %p206 = pnand %p204, %p205
    %p207 = pneg %p206
    // Predicated region
    $region37: #{mlp_forward.1} parent=5 // pred_check
      _
    $region38: #{mlp_forward.1} parent=5 // pred_check_branch
      %209 = sbr.rel (%p206) target = $region40
    $region39: #{mlp_forward.1} parent=5 // pred_region
      %s210 = ssub.s32 %s11, 1
      %p211 = scmp.lt.s32.totalorder %s20, 1
      %s212 = scalar_select %p211, %s20, 1
      %p213 = scmp.lt.s32.totalorder %s21, 0
      %s214 = scalar_select %p213, %s21, 0
      %s215 = sadd.s32 %s214, %s212
      %s216 = smul.addr %s215, 8
      %s217 = scalar_lea.vmem %s0, %s216
      %p218 = pneg %p51
      %p219 = pneg %p48
      %p220 = pneg %p72
      %p221 = pneg %p69
      %p222 = pneg %p93
      %p223 = pneg %p90
      %p224 = pneg %p114
      %p225 = pneg %p111
      %p226 = pneg %p135
      %p227 = pneg %p132
      %p228 = pneg %p163
      %p229 = pneg %p160
      %p230 = scmp.lt.s32.totalorder %s20, 1
      %s231 = scalar_select %p230, %s20, 1
      %p232 = scmp.lt.s32.totalorder %s21, 0
      %s233 = scalar_select %p232, %s21, 0
      %s234 = smul.addr %s231, 2
      %s235 = sadd.s32 %s233, %s234
      %s236 = smul.addr %s235, 8
      %s237 = scalar_lea.vmem %s5, %s236
      %p238 = scmp.lt.s32.totalorder %s20, 1
      %s239 = scalar_select %p238, %s20, 1
      %p240 = scmp.lt.s32.totalorder %s21, 0
      %s241 = scalar_select %p240, %s21, 0
      %s242 = sadd.s32 %s241, %s239
      %s243 = smul.addr %s242, 8
      %s244 = scalar_lea.vmem %s0, %s243
      %p245 = scmp.lt.s32.totalorder %s20, 1
      %s246 = scalar_select %p245, %s20, 1
      %p247 = scmp.lt.s32.totalorder %s21, 0
      %s248 = scalar_select %p247, %s21, 0
      %s249 = smul.addr %s246, 2
      %s250 = sadd.s32 %s248, %s249
      %s251 = smul.addr %s250, 8
      %s252 = scalar_lea.vmem %s5, %s251
      %v253 = vld [vmem:[%s1] sm:$0xff]
      %v254 = vld [vmem:[%s1 + $0x8] sm:$0xff]
      %v255 = vld [vmem:[%s1 + $0x10] sm:$0xff]
      %v256 = vld [vmem:[%s1 + $0x18] sm:$0xff]
      %v257 = vld [vmem:[%s2] sm:$0xff]
      %v258 = vld [vmem:[%s2 + $0x8] sm:$0xff]
      %v259 = vld [vmem:[%s2 + $0x10] sm:$0xff]
      %v260 = vld [vmem:[%s2 + $0x18] sm:$0xff]
      %v261 = vld [vmem:[%s3] sm:$0xff]
      %v262 = vld [vmem:[%s3 + $0x8] sm:$0xf]
      %v263 = vld [vmem:[%s4] sm:$0xff]
      %v264 = vld [vmem:[%s4 + $0x8] sm:$0xf]
      %v265 = vld [vmem:[%s244] sm:$0xff]
      %267 = vset.pattern.permute.xlu0 0
      %268 = vperm.xlu0 %267, %v257
      %v269 = vpop.permute.xlu0 %268
      %272 = vset.pattern.permute.xlu0 0
      %273 = vperm.xlu0 %272, %v258
      %v274 = vpop.permute.xlu0 %273
      %277 = vset.pattern.permute.xlu0 0
      %278 = vperm.xlu0 %277, %v259
      %v279 = vpop.permute.xlu0 %278
      %282 = vset.pattern.permute.xlu0 0
      %283 = vperm.xlu0 %282, %v260
      %v284 = vpop.permute.xlu0 %283
      %vm286 = vcmask 64512
      %v288 = vsel %vm286, %v253, 0
      %v291 = vsel %vm286, %v254, 0
      %v294 = vsel %vm286, %v255, 0
      %v297 = vsel %vm286, %v256, 0
      %299 = vmatprep.subr.mxu0 0.0
      %300 = vmatpush1.msra.mxu0 %v265
      %301 = vmatprep.subr.mxu0 0.0
      %302 = vmatpush1.msra.mxu0 0.0
      %303 = vmatprep.subr.mxu0 0.0
      %304 = vmatpush1.msra.mxu0 0.0
      %305 = vmatprep.subr.mxu0 0.0
      %306 = vmatpush1.msra.mxu0 0.0
      %307 = vmatprep.subr.mxu0 0.0
      %308 = vmatpush1.msra.mxu0 0.0
      %309 = vmatprep.subr.mxu0 0.0
      %310 = vmatpush1.msra.mxu0 0.0
      %311 = vmatprep.subr.mxu0 0.0
      %312 = vmatpush1.msra.mxu0 0.0
      %313 = vmatprep.subr.mxu0 0.0
      %314 = vmatpush1.msra.mxu0 0.0
      %315 = vmatprep.subr.mxu0 0.0
      %316 = vmatpush1.msra.mxu0 0.0
      %317 = vmatprep.subr.mxu0 0.0
      %318 = vmatpush1.msra.mxu0 0.0
      %319 = vmatprep.subr.mxu0 0.0
      %320 = vmatpush1.msra.mxu0 0.0
      %321 = vmatprep.subr.mxu0 0.0
      %322 = vmatpush1.msra.mxu0 0.0
      %323 = vmatprep.subr.mxu0 0.0
      %324 = vmatpush1.msra.mxu0 0.0
      %325 = vmatprep.subr.mxu0 0.0
      %326 = vmatpush1.msra.mxu0 0.0
      %327 = vmatprep.subr.mxu0 0.0
      %328 = vmatpush1.msra.mxu0 0.0
      %329 = vmatprep.subr.mxu0 0.0
      %330 = vmatpush1.msra.mxu0 0.0
      %331 = vmatprep.subr.mxu0 0.0
      %332 = vmatpush1.msra.mxu0 0.0
      %333 = vmatprep.subr.mxu0 0.0
      %334 = vmatpush1.msra.mxu0 0.0
      %335 = vmatprep.subr.mxu0 0.0
      %336 = vmatpush1.msra.mxu0 0.0
      %337 = vmatprep.subr.mxu0 0.0
      %338 = vmatpush1.msra.mxu0 0.0
      %339 = vmatprep.subr.mxu0 0.0
      %340 = vmatpush1.msra.mxu0 0.0
      %341 = vmatprep.subr.mxu0 0.0
      %342 = vmatpush1.msra.mxu0 0.0
      %343 = vmatprep.subr.mxu0 0.0
      %344 = vmatpush1.msra.mxu0 0.0
      %345 = vmatprep.subr.mxu0 0.0
      %346 = vmatpush1.msra.mxu0 0.0
      %347 = vmatprep.subr.mxu0 0.0
      %348 = vmatpush1.msra.mxu0 0.0
      %349 = vmatprep.subr.mxu0 0.0
      %350 = vmatpush1.msra.mxu0 0.0
      %351 = vmatprep.subr.mxu0 0.0
      %352 = vmatpush1.msra.mxu0 0.0
      %353 = vmatprep.subr.mxu0 0.0
      %354 = vmatpush1.msra.mxu0 0.0
      %355 = vmatprep.subr.mxu0 0.0
      %356 = vmatpush1.msra.mxu0 0.0
      %357 = vmatprep.subr.mxu0 0.0
      %358 = vmatpush1.msra.mxu0 0.0
      %359 = vmatprep.subr.mxu0 0.0
      %360 = vmatpush1.msra.mxu0 0.0
      %361 = vmatprep.subr.mxu0 0.0
      %362 = vmatpush1.msra.mxu0 0.0
      %363 = vmatprep.mubr.f32.mxu0 0.0
      %364 = vmatmul.mubr.f32.gmra.mrb[0].mxu0 %v288
      %v365 = vpop.f32.mrb[0].mxu0
      %v366 = vadd.f32 %v269, %v365
      %v367 = vpop.f32.mrb[0].mxu0
      %368 = vmatprep.mubr.f32.mxu0 0.0
      %369 = vmatmul.mubr.f32.gmra.mrb[0].mxu0 %v291
      %v370 = vpop.f32.mrb[0].mxu0
      %v371 = vadd.f32 %v274, %v370
      %v372 = vpop.f32.mrb[0].mxu0
      %373 = vmatprep.mubr.f32.mxu0 0.0
      %374 = vmatmul.mubr.f32.gmra.mrb[0].mxu0 %v294
      %v375 = vpop.f32.mrb[0].mxu0
      %v376 = vadd.f32 %v279, %v375
      %v377 = vpop.f32.mrb[0].mxu0
      %378 = vmatprep.mubr.f32.mxu0 0.0
      %379 = vmatmul.mubr.f32.gmra.mrb[0].mxu0 %v297
      %v380 = vpop.f32.mrb[0].mxu0
      %v381 = vadd.f32 %v284, %v380
      %v382 = vpop.f32.mrb[0].mxu0
      %383 = vdwg.mxu0
      %v384 = vmax.f32 %v366, 0.0
      %v385 = vmax.f32 %v371, 0.0
      %v386 = vmax.f32 %v376, 0.0
      %v387 = vmax.f32 %v381, 0.0
      %389 = vset.pattern.permute.xlu0 0
      %390 = vperm.xlu0 %389, %v263
      %v391 = vpop.permute.xlu0 %390
      %394 = vset.pattern.permute.xlu0 0
      %395 = vperm.xlu0 %394, %v264
      %v396 = vpop.permute.xlu0 %395
      %vm398 = vcmask 261120
      %v400 = vsel %vm398, %v261, 0
      %v403 = vsel %vm398, %v262, 0
      %405 = vmatprep.subr.mxu0 0.0
      %406 = vmatpush1.msra.mxu0 %v384
      %407 = vmatprep.subr.mxu0 0.0
      %408 = vmatpush1.msra.mxu0 %v385
      %409 = vmatprep.subr.mxu0 0.0
      %410 = vmatpush1.msra.mxu0 %v386
      %411 = vmatprep.subr.mxu0 0.0
      %412 = vmatpush1.msra.mxu0 %v387
      %413 = vmatprep.subr.mxu0 0.0
      %414 = vmatpush1.msra.mxu0 0.0
      %415 = vmatprep.subr.mxu0 0.0
      %416 = vmatpush1.msra.mxu0 0.0
      %417 = vmatprep.subr.mxu0 0.0
      %418 = vmatpush1.msra.mxu0 0.0
      %419 = vmatprep.subr.mxu0 0.0
      %420 = vmatpush1.msra.mxu0 0.0
      %421 = vmatprep.subr.mxu0 0.0
      %422 = vmatpush1.msra.mxu0 0.0
      %423 = vmatprep.subr.mxu0 0.0
      %424 = vmatpush1.msra.mxu0 0.0
      %425 = vmatprep.subr.mxu0 0.0
      %426 = vmatpush1.msra.mxu0 0.0
      %427 = vmatprep.subr.mxu0 0.0
      %428 = vmatpush1.msra.mxu0 0.0
      %429 = vmatprep.subr.mxu0 0.0
      %430 = vmatpush1.msra.mxu0 0.0
      %431 = vmatprep.subr.mxu0 0.0
      %432 = vmatpush1.msra.mxu0 0.0
      %433 = vmatprep.subr.mxu0 0.0
      %434 = vmatpush1.msra.mxu0 0.0
      %435 = vmatprep.subr.mxu0 0.0
      %436 = vmatpush1.msra.mxu0 0.0
      %437 = vmatprep.subr.mxu0 0.0
      %438 = vmatpush1.msra.mxu0 0.0
      %439 = vmatprep.subr.mxu0 0.0
      %440 = vmatpush1.msra.mxu0 0.0
      %441 = vmatprep.subr.mxu0 0.0
      %442 = vmatpush1.msra.mxu0 0.0
      %443 = vmatprep.subr.mxu0 0.0
      %444 = vmatpush1.msra.mxu0 0.0
      %445 = vmatprep.subr.mxu0 0.0
      %446 = vmatpush1.msra.mxu0 0.0
      %447 = vmatprep.subr.mxu0 0.0
      %448 = vmatpush1.msra.mxu0 0.0
      %449 = vmatprep.subr.mxu0 0.0
      %450 = vmatpush1.msra.mxu0 0.0
      %451 = vmatprep.subr.mxu0 0.0
      %452 = vmatpush1.msra.mxu0 0.0
      %453 = vmatprep.subr.mxu0 0.0
      %454 = vmatpush1.msra.mxu0 0.0
      %455 = vmatprep.subr.mxu0 0.0
      %456 = vmatpush1.msra.mxu0 0.0
      %457 = vmatprep.subr.mxu0 0.0
      %458 = vmatpush1.msra.mxu0 0.0
      %459 = vmatprep.subr.mxu0 0.0
      %460 = vmatpush1.msra.mxu0 0.0
      %461 = vmatprep.subr.mxu0 0.0
      %462 = vmatpush1.msra.mxu0 0.0
      %463 = vmatprep.subr.mxu0 0.0
      %464 = vmatpush1.msra.mxu0 0.0
      %465 = vmatprep.subr.mxu0 0.0
      %466 = vmatpush1.msra.mxu0 0.0
      %467 = vmatprep.subr.mxu0 0.0
      %468 = vmatpush1.msra.mxu0 0.0
      %469 = vmatprep.mubr.f32.mxu0 0.0
      %470 = vmatmul.mubr.f32.gmra.mrb[0].mxu0 %v400
      %v471 = vpop.f32.mrb[0].mxu0
      %v472 = vadd.f32 %v391, %v471
      %v473 = vpop.f32.mrb[0].mxu0
      %474 = vmatprep.mubr.f32.mxu0 0.0
      %475 = vmatmul.mubr.f32.gmra.mrb[0].mxu0 %v403
      %v476 = vpop.f32.mrb[0].mxu0
      %v477 = vadd.f32 %v396, %v476
      %v478 = vpop.f32.mrb[0].mxu0
      %479 = vdwg.mxu0
      %vm480 = vcmask 130048
      %481 = vst.msk [vmem:[%s252] sm:$0xff] %vm480, %v472
      %vm482 = vcmask 125952
      %483 = vst.msk [vmem:[%s252 + $0x8] sm:$0xf] %vm482, %v477
      %p484 = scmp.lt.s32.totalorder %s20, 1
      %s485 = scalar_select %p484, %s20, 1
      %p486 = scmp.lt.s32.totalorder %s21, 0
      %s487 = scalar_select %p486, %s21, 0
      %s488 = smul.addr %s485, 2
      %s489 = sadd.s32 %s487, %s488
      %s490 = smul.addr %s489, 8
      %s491 = scalar_lea.vmem %s5, %s490
      // Predicated region
      $region41: #{mlp_forward.1} parent=39 // pred_check
        %p492 = pneg %p160
      $region42: #{mlp_forward.1} parent=39 // pred_check_branch
        %494 = sbr.rel (%p492) target = $region44
      $region43: #{mlp_forward.1} parent=39 // pred_region
        _
      $region44: #{mlp_forward.1} parent=39 // pred_fallthru
        _
    $region40: #{mlp_forward.1} parent=5 // pred_fallthru
      _
    %p495 = scmp.le.s32.totalorder 2, %s11
    // Predicated region
    $region45: #{mlp_forward.1} parent=5 // pred_check
      %p496 = pneg %p495
    $region46: #{mlp_forward.1} parent=5 // pred_check_branch
      %498 = sbr.rel (%p496) target = $region48
    $region47: #{mlp_forward.1} parent=5 // pred_region
      %s499 = ssub.s32 %s11, 2
      // Predicated region
      $region49: #{mlp_forward.1} parent=47 // pred_check
        %p500 = pneg %p166
      $region50: #{mlp_forward.1} parent=47 // pred_check_branch
        %502 = sbr.rel (%p500) target = $region52
      $region51: #{mlp_forward.1} parent=47 // pred_region
        %p503 = scmp.lt.s32.totalorder %s22, 1
        %s504 = scalar_select %p503, %s22, 1
        %p505 = scmp.lt.s32.totalorder %s23, 0
        %s506 = scalar_select %p505, %s23, 0
        %s507 = smul.addr %s504, 2
        %s508 = sadd.s32 %s506, %s507
        %s509 = smul.addr %s508, 8
        %s510 = scalar_lea.vmem %s5, %s509
      $region52: #{mlp_forward.1} parent=47 // pred_fallthru
        _
    $region48: #{mlp_forward.1} parent=5 // pred_fallthru
      _
  $region6: #{mlp_forward.1} parent=0 // loop_footer
    %s15 = sadd.s32 1, %s11
  $region7: #{mlp_forward.1} parent=0 // loop_footer_branch
    %10 = sbr.rel target = $region3
  $region8: #{mlp_forward.1} parent=0 // loop_exit
    _

</llo_original>
